<compile_context>
chip_gen: v7x
topology: tpu7x:2x2x1
jax: 0.10.0
libtpu: 0.0.40
codegen_flags: <defaults>
</compile_context>

<pallas_src>
import jax
import jax.numpy as jnp
from jax.experimental import pallas as pl
from jax.experimental.pallas import tpu as pltpu


def _identity_kernel(x_ref, o_ref):
    # Pure pass-through: copy the current VMEM tile of x into the output tile.
    o_ref[...] = x_ref[...]


# Prefer a large multiple-of-128 lane dimension (lane-dense output => unmasked vst).
_LANE_CANDIDATES = (1024, 512, 256, 128)
# ~4 MiB tiles: 2 buffers (in) + 2 buffers (out) fits comfortably in the 32 MiB
# default scoped VMEM on every generation (incl. v7x's 64 MiB physical VMEM).
_TARGET_TILE_BYTES = 4 * 1024 * 1024


def _choose_lane_layout(n: int):
    for lane in _LANE_CANDIDATES:
        if n % lane == 0:
            return n // lane, lane
    return None


@jax.jit
def identity(x: jax.Array) -> jax.Array:
    """Pallas TPU implementation of Identity.forward(x) -> x."""
    orig_shape = x.shape
    n = x.size
    if n == 0:
        return x

    layout = _choose_lane_layout(n)
    if layout is not None:
        rows, lane = layout
        x2d = x.reshape(rows, lane)
        row_bytes = lane * x.dtype.itemsize
        if rows * row_bytes <= _TARGET_TILE_BYTES:
            block_rows = rows                       # small tensor: single block
        else:
            # multiple-of-8 sublane tiles, ~_TARGET_TILE_BYTES each, pipelined over a grid
            block_rows = max(8, (_TARGET_TILE_BYTES // row_bytes) // 8 * 8)
    else:
        # Total size not a multiple of 128: fall back to a whole-array single block
        # (block_shape == full array dims is always legal).
        x2d = x.reshape(1, n) if x.ndim < 2 else x.reshape(-1, orig_shape[-1])
        rows, lane = x2d.shape
        block_rows = rows

    grid = (pl.cdiv(rows, block_rows),)

    out2d = pl.pallas_call(
        _identity_kernel,
        out_shape=jax.ShapeDtypeStruct((rows, lane), x2d.dtype),
        grid=grid,
        in_specs=[pl.BlockSpec((block_rows, lane), lambda i: (i, 0))],
        out_specs=pl.BlockSpec((block_rows, lane), lambda i: (i, 0)),
        input_output_aliases={0: 0},                # output may reuse the input buffer
        compiler_params=pltpu.CompilerParams(
            dimension_semantics=("parallel",),      # shard independent tiles across TCs (v7x)
        ),
        cost_estimate=pl.CostEstimate(
            flops=0,
            transcendentals=0,
            bytes_accessed=2 * n * x.dtype.itemsize,
        ),
    )(x2d)

    return out2d.reshape(orig_shape)


if __name__ == "__main__":
    key = jax.random.PRNGKey(0)
    # Small NCHW input: batch=2, channels=4, spatial=16x16
    x = jax.random.normal(key, (2, 4, 16, 16), dtype=jnp.float32)

    y = identity(x)
    jax.block_until_ready(y)

    assert y.shape == x.shape, f"shape mismatch: {y.shape} vs {x.shape}"
    assert y.dtype == x.dtype, f"dtype mismatch: {y.dtype} vs {x.dtype}"
    assert bool(jnp.array_equal(y, x)), "Identity output does not match input"

    print("KERNEL_OK")
</pallas_src>

<mosaic_0001>
module attributes {stable_mosaic.version = 11 : i64} {
  func.func @_identity_kernel(%arg0: i32, %arg1: memref<2x1024xf32, #tpu.memory_space<vmem>>, %arg2: memref<2x1024xf32, #tpu.memory_space<vmem>>) attributes {dimension_semantics = [#tpu.dimension_semantics<parallel>], iteration_bounds = array<i64: 1>, scalar_prefetch = 0 : i64, scratch_operands = 0 : i64, tpu.core_type = #tpu.core_type<tc>, window_params = [{transform_indices = @transform_0, window_bounds = array<i64: 2, 1024>}, {transform_indices = @transform_1, window_bounds = array<i64: 2, 1024>}]} {
    %c0 = arith.constant 0 : index
    %c0_0 = arith.constant 0 : index
    %0 = vector.load %arg1[%c0, %c0_0] : memref<2x1024xf32, #tpu.memory_space<vmem>>, vector<2x1024xf32>
    %c0_1 = arith.constant 0 : index
    %c0_2 = arith.constant 0 : index
    %1 = vector.load %arg2[%c0_1, %c0_2] : memref<2x1024xf32, #tpu.memory_space<vmem>>, vector<2x1024xf32>
    tpu.vector_store %arg2[%c0_1, %c0_2], %0 {strides = array<i32>} : memref<2x1024xf32, #tpu.memory_space<vmem>>, vector<2x1024xf32>,
    return
  }
  func.func @transform_0(%arg0: i32) -> (i32, i32) {
    %c0_i32 = arith.constant 0 : i32
    %c0_i32_0 = arith.constant 0 : i32
    return %arg0, %c0_i32 : i32, i32
  }
  func.func @transform_1(%arg0: i32) -> (i32, i32) {
    %c0_i32 = arith.constant 0 : i32
    %c0_i32_0 = arith.constant 0 : i32
    return %arg0, %c0_i32 : i32, i32
  }
}

</mosaic_0001>

<llo_original>
// kernel: identity.1
$region0: #{identity.1}
  #allocation0 [shape = 'u32[]', space=smem, size = 0x4, offset = 0x4, fixed_abs, tag = 'smem constant byte address 0x4 - core index']
  #allocation1 [shape = 'u32[144,128]{1,0:T(1,128)}', space=vmem, size = 0x12000, scoped, tag = 'internal scratch']
  %s0 = inlined_call_operand.vmem [shape: f32[2,1024], index: 0, kind: input, shape index: {}, may-alias: {0,1}]
  %s1 = inlined_call_operand.vmem [shape: f32[2,1024], index: 1, kind: output, shape index: {}, may-alias: {0,1}]
  %s2 = sld [smem:[#allocation0]]
  $region14: #{identity.1} parent=0
    _
  %s4 = ssub.s32 1, %s2
  %s5 = scalar_select 0, %s4, %s2
  // Predicated region
  $region2: #{identity.1} parent=0 // pred_check
    _
  $region3: #{identity.1} parent=0 // pred_check_branch
    %7 = sbr.rel (0) target = $region5
  $region4: #{identity.1} parent=0 // pred_region
    _
  $region5: #{identity.1} parent=0 // pred_fallthru
    _
  %v8 = vld [vmem:[%s0] sm:$0xff]
  %v9 = vld [vmem:[%s0 + $0x8] sm:$0xff]
  %10 = vst [vmem:[%s1] sm:$0xff] %v8
  %11 = vst [vmem:[%s1 + $0x8] sm:$0xff] %v9
  // Predicated region
  $region6: #{identity.1} parent=0 // pred_check
    _
  $region7: #{identity.1} parent=0 // pred_check_branch
    %13 = sbr.rel (0) target = $region9
  $region8: #{identity.1} parent=0 // pred_region
    _
  $region9: #{identity.1} parent=0 // pred_fallthru
    _
  // Predicated region
  $region10: #{identity.1} parent=0 // pred_check
    _
  $region11: #{identity.1} parent=0 // pred_check_branch
    %15 = sbr.rel (0) target = $region13
  $region12: #{identity.1} parent=0 // pred_region
    _
  $region13: #{identity.1} parent=0 // pred_fallthru
    _

</llo_original>
